<compile_context>
chip_gen: v7x
topology: tpu7x:2x2x1
jax: 0.10.0
libtpu: 0.0.40
codegen_flags: <defaults>
</compile_context>

<pallas_src>
import functools

import jax
import jax.numpy as jnp
from jax.experimental import pallas as pl
from jax.experimental.pallas import tpu as pltpu


def _shift_cols(v, s):
    """Return w with w[:, c] = v[:, c + s] for 0 <= c + s < width, else 0.

    `s` is a static Python int; lowers to a lane slice + concat with zeros.
    """
    if s == 0:
        return v
    width = v.shape[1]
    if abs(s) >= width:
        return jnp.zeros_like(v)
    zeros = jnp.zeros((v.shape[0], abs(s)), v.dtype)
    if s > 0:
        return jnp.concatenate([v[:, s:], zeros], axis=1)
    return jnp.concatenate([zeros, v[:, :s]], axis=1)


def _temporal_block_kernel(
    x_ref,     # (Bb, C_in, Lp)    bf16  (zero-padded in [L, Lp))
    wbig_ref,  # (H+O, (K+1)*C_in) bf16  fused conv1 + 1x1-residual weights
    bbig_ref,  # (H+O, 1)          f32   conv1 bias stacked with residual bias
    w2s_ref,   # (O, K*H)          bf16  conv2 weights, taps stacked on contraction
    b2_ref,    # (O, 1)            f32
    a1_ref,    # (1,)              f32   PReLU alpha 1 (SMEM)
    a2_ref,    # (1,)              f32   PReLU alpha 2 (SMEM)
    o_ref,     # (Bb, O, Lp)       f32
    *,
    K, dilation, left, L, Lp, H, O, Bb,
):
    a1 = a1_ref[0]
    a2 = a2_ref[0]
    wbig = wbig_ref[...]
    bbig = bbig_ref[...]
    w2s = w2s_ref[...]
    b2 = b2_ref[...]

    col = None
    if Lp > L:
        col = jax.lax.broadcasted_iota(jnp.int32, (1, Lp), 1)

    for i in range(Bb):                        # static unroll over the batch block
        x = x_ref[i]                           # (C_in, Lp) bf16

        # ---- conv1 + residual: one MXU dot ----------------------------------
        # im2col over the K taps, plus raw x rows for the 1x1 downsample conv.
        # 'same' zero padding comes from _shift_cols' zero fill at the edges
        # and from the zero-padded [L, Lp) tail of x.
        taps = [_shift_cols(x, t * dilation - left) for t in range(K)]
        taps.append(x)
        op1 = jnp.concatenate(taps, axis=0)    # ((K+1)*C_in, Lp) bf16

        acc = jnp.dot(wbig, op1, preferred_element_type=jnp.float32) + bbig
        h = acc[:H]                            # (H, Lp) conv1 pre-activation
        res = acc[H:]                          # (O, Lp) residual branch
        h = jnp.where(h >= 0, h, a1 * h)       # PReLU (scalar alpha)

        hb = h.astype(jnp.bfloat16)
        if Lp > L:
            # The true hidden signal is only L long; its 'same' padding is zero.
            hb = jnp.where(col < L, hb, jnp.zeros_like(hb))

        # ---- conv2: one MXU dot over the K stacked taps of h ----------------
        taps2 = [_shift_cols(hb, t * dilation - left) for t in range(K)]
        op2 = jnp.concatenate(taps2, axis=0)   # (K*H, Lp) bf16

        out = jnp.dot(w2s, op2, preferred_element_type=jnp.float32) + b2
        out = jnp.where(out >= 0, out, a2 * out)   # PReLU (scalar alpha)

        o_ref[i] = (out + res).astype(o_ref.dtype)


def temporal_block_forward(x, params, *, kernel_size, dilation, batch_block=1):
    """x: (B, C_in, L) float32. Params in PyTorch Conv1d layouts:
    w1 (H, C_in, K), b1 (H,), a1 (1,), w2 (O, H, K), b2 (O,), a2 (1,),
    wd (O, C_in, 1), bd (O,).  Returns (B, O, L) float32."""
    w1, b1, a1, w2, b2, a2, wd, bd = params
    B, C_in, L = x.shape
    K = kernel_size
    H = w1.shape[0]
    O = w2.shape[0]

    # PyTorch Conv1d(padding='same'): total = dilation*(K-1), left = total//2.
    total = dilation * (K - 1)
    left = total // 2

    # Lane-dense length: pad L up to a multiple of 128 (no-op if aligned).
    Lp = ((L + 127) // 128) * 128
    if Lp != L:
        x = jnp.pad(x, ((0, 0), (0, 0), (0, Lp - L)))

    Bb = batch_block
    assert B % Bb == 0, "batch_block must divide batch size"

    # Stack conv1's K taps + the 1x1 residual conv into one weight matrix:
    #   rows [0, H):    conv1    -> columns [t*C_in, (t+1)*C_in) = w1[:, :, t]
    #   rows [H, H+O):  residual -> columns [K*C_in, (K+1)*C_in) = wd[:, :, 0]
    w1s = jnp.transpose(w1, (0, 2, 1)).reshape(H, K * C_in)
    wbig = jnp.concatenate(
        [
            jnp.concatenate([w1s, jnp.zeros((H, C_in), w1s.dtype)], axis=1),
            jnp.concatenate([jnp.zeros((O, K * C_in), wd.dtype), wd[:, :, 0]], axis=1),
        ],
        axis=0,
    ).astype(jnp.bfloat16)                                   # (H+O, (K+1)*C_in)
    bbig = jnp.concatenate([b1, bd]).reshape(H + O, 1).astype(jnp.float32)

    w2s = jnp.transpose(w2, (0, 2, 1)).reshape(O, K * H).astype(jnp.bfloat16)
    b2c = b2.reshape(O, 1).astype(jnp.float32)

    xb = x.astype(jnp.bfloat16)
    a1s = a1.reshape(1).astype(jnp.float32)
    a2s = a2.reshape(1).astype(jnp.float32)

    kern = functools.partial(
        _temporal_block_kernel,
        K=K, dilation=dilation, left=left, L=L, Lp=Lp, H=H, O=O, Bb=Bb,
    )

    y = pl.pallas_call(
        kern,
        out_shape=jax.ShapeDtypeStruct((B, O, Lp), jnp.float32),
        grid_spec=pltpu.PrefetchScalarGridSpec(
            num_scalar_prefetch=0,
            grid=(B // Bb,),
            in_specs=[
                pl.BlockSpec((Bb, C_in, Lp), lambda b: (b, 0, 0)),         # x
                pl.BlockSpec((H + O, (K + 1) * C_in), lambda b: (0, 0)),   # wbig
                pl.BlockSpec((H + O, 1), lambda b: (0, 0)),                # bbig
                pl.BlockSpec((O, K * H), lambda b: (0, 0)),                # w2s
                pl.BlockSpec((O, 1), lambda b: (0, 0)),                    # b2
                pl.BlockSpec(memory_space=pltpu.MemorySpace.SMEM),         # a1
                pl.BlockSpec(memory_space=pltpu.MemorySpace.SMEM),         # a2
            ],
            out_specs=pl.BlockSpec((Bb, O, Lp), lambda b: (b, 0, 0)),
        ),
        compiler_params=pltpu.CompilerParams(
            dimension_semantics=("parallel",),       # both TCs on v7x when B >= 2
            vmem_limit_bytes=48 * 1024 * 1024,       # safe on v5e/v6e/v7x
        ),
    )(xb, wbig, bbig, w2s, b2c, a1s, a2s)

    if Lp != L:
        y = y[:, :, :L]
    return y


def reference_forward(x, params, *, kernel_size, dilation):
    """Pure-JAX reference matching the PyTorch module, with the same bf16
    operand rounding as the kernel's MXU path (so the check is tight)."""
    w1, b1, a1, w2, b2, a2, wd, bd = params
    B, C_in, L = x.shape
    K = kernel_size
    total = dilation * (K - 1)
    left = total // 2
    right = total - left

    q = lambda t: t.astype(jnp.bfloat16).astype(jnp.float32)

    def dconv(inp, w, b):                      # w: (Cout, Cin, K) torch layout
        ip = jnp.pad(inp, ((0, 0), (0, 0), (left, right)))
        y = jnp.zeros((B, w.shape[0], L), jnp.float32)
        for t in range(K):
            xs = ip[:, :, t * dilation: t * dilation + L]
            y = y + jnp.einsum("oc,bcl->bol", w[:, :, t], xs,
                               precision=jax.lax.Precision.HIGHEST)
        return y + b[None, :, None]

    def prelu(v, a):
        return jnp.where(v >= 0, v, a[0] * v)

    xq = q(x)
    h = prelu(dconv(xq, q(w1), b1), a1)
    h = q(h)                                   # kernel feeds conv2 in bf16
    out = prelu(dconv(h, q(w2), b2), a2)
    res = jnp.einsum("oc,bcl->bol", q(wd[:, :, 0]), xq,
                     precision=jax.lax.Precision.HIGHEST) + bd[None, :, None]
    return out + res


if __name__ == "__main__":
    # Small shapes; L chosen as a multiple of 128 so stores are lane-dense.
    B, C_IN, HID, C_OUT = 2, 4, 32, 8
    L = 256
    KSIZE, DILATION = 3, 2

    key = jax.random.PRNGKey(0)
    kx, k1, k2, k3, kb1, kb2, kbd = jax.random.split(key, 7)

    x = jax.random.normal(kx, (B, C_IN, L), dtype=jnp.float32)

    # Parameters in PyTorch Conv1d layout; init mirrors init_weights():
    # conv weights ~ N(0, 0.01), PReLU alpha = 0.25, small random biases.
    w1 = 0.01 * jax.random.normal(k1, (HID, C_IN, KSIZE), dtype=jnp.float32)
    b1 = 0.01 * jax.random.normal(kb1, (HID,), dtype=jnp.float32)
    a1 = jnp.full((1,), 0.25, dtype=jnp.float32)
    w2 = 0.01 * jax.random.normal(k2, (C_OUT, HID, KSIZE), dtype=jnp.float32)
    b2 = 0.01 * jax.random.normal(kb2, (C_OUT,), dtype=jnp.float32)
    a2 = jnp.full((1,), 0.25, dtype=jnp.float32)
    wd = 0.01 * jax.random.normal(k3, (C_OUT, C_IN, 1), dtype=jnp.float32)
    bd = 0.01 * jax.random.normal(kbd, (C_OUT,), dtype=jnp.float32)

    params = (w1, b1, a1, w2, b2, a2, wd, bd)

    y = temporal_block_forward(x, params, kernel_size=KSIZE, dilation=DILATION)
    y = jax.block_until_ready(y)

    y_ref = reference_forward(x, params, kernel_size=KSIZE, dilation=DILATION)
    assert y.shape == (B, C_OUT, L)
    assert jnp.allclose(y, y_ref, atol=1e-4, rtol=1e-3), "mismatch vs reference"

    print("KERNEL_OK")
</pallas_src>

<mosaic_0001>
module attributes {stable_mosaic.version = 11 : i64} {
  func.func @_temporal_block_kernel(%arg0: i32, %arg1: memref<1x4x256xbf16, #tpu.memory_space<vmem>>, %arg2: memref<40x16xbf16, #tpu.memory_space<vmem>>, %arg3: memref<40x1xf32, #tpu.memory_space<vmem>>, %arg4: memref<8x96xbf16, #tpu.memory_space<vmem>>, %arg5: memref<8x1xf32, #tpu.memory_space<vmem>>, %arg6: memref<1xf32, #tpu.memory_space<smem>>, %arg7: memref<1xf32, #tpu.memory_space<smem>>, %arg8: memref<1x8x256xf32, #tpu.memory_space<vmem>>) attributes {dimension_semantics = [#tpu.dimension_semantics<parallel>], iteration_bounds = array<i64: 2>, scalar_prefetch = 0 : i64, scratch_operands = 0 : i64, tpu.core_type = #tpu.core_type<tc>, window_params = [{transform_indices = @transform_0, window_bounds = array<i64: 1, 4, 256>}, {pipeline_mode = #tpu.pipeline_mode<synchronous>, transform_indices = @transform_1, window_bounds = array<i64: 40, 16>}, {pipeline_mode = #tpu.pipeline_mode<synchronous>, transform_indices = @transform_2, window_bounds = array<i64: 40, 1>}, {pipeline_mode = #tpu.pipeline_mode<synchronous>, transform_indices = @transform_3, window_bounds = array<i64: 8, 96>}, {pipeline_mode = #tpu.pipeline_mode<synchronous>, transform_indices = @transform_4, window_bounds = array<i64: 8, 1>}, {transform_indices = @transform_5, window_bounds = array<i64: 1>}, {transform_indices = @transform_6, window_bounds = array<i64: 1>}, {transform_indices = @transform_7, window_bounds = array<i64: 1, 8, 256>}]} {
    %c0 = arith.constant 0 : index
    %0 = memref.load %arg6[%c0] : memref<1xf32, #tpu.memory_space<smem>>
    %c0_0 = arith.constant 0 : index
    %1 = memref.load %arg7[%c0_0] : memref<1xf32, #tpu.memory_space<smem>>
    %c0_1 = arith.constant 0 : index
    %c0_2 = arith.constant 0 : index
    %2 = vector.load %arg2[%c0_1, %c0_2] : memref<40x16xbf16, #tpu.memory_space<vmem>>, vector<40x16xbf16>
    %c0_3 = arith.constant 0 : index
    %c0_4 = arith.constant 0 : index
    %3 = vector.load %arg3[%c0_3, %c0_4] : memref<40x1xf32, #tpu.memory_space<vmem>>, vector<40x1xf32>
    %c0_5 = arith.constant 0 : index
    %c0_6 = arith.constant 0 : index
    %4 = vector.load %arg4[%c0_5, %c0_6] : memref<8x96xbf16, #tpu.memory_space<vmem>>, vector<8x96xbf16>
    %c0_7 = arith.constant 0 : index
    %c0_8 = arith.constant 0 : index
    %5 = vector.load %arg5[%c0_7, %c0_8] : memref<8x1xf32, #tpu.memory_space<vmem>>, vector<8x1xf32>
    %c0_9 = arith.constant 0 : index
    %c0_10 = arith.constant 0 : index
    %c0_11 = arith.constant 0 : index
    %6 = vector.load %arg1[%c0_9, %c0_10, %c0_11] : memref<1x4x256xbf16, #tpu.memory_space<vmem>>, vector<1x4x256xbf16>
    %7 = vector.shape_cast %6 : vector<1x4x256xbf16> to vector<4x256xbf16>
    %cst = arith.constant 0.000000e+00 : bf16
    %8 = vector.broadcast %cst : bf16 to vector<4x2xbf16>
    %9 = vector.extract_strided_slice %7 {offsets = [0, 0], sizes = [4, 254], strides = [1, 1]} : vector<4x256xbf16> to vector<4x254xbf16>
    %10 = tpu.concatenate %8, %9 in 1 : vector<4x2xbf16>, vector<4x254xbf16> -> vector<4x256xbf16>
    %cst_12 = arith.constant 0.000000e+00 : bf16
    %11 = vector.broadcast %cst_12 : bf16 to vector<4x2xbf16>
    %12 = vector.extract_strided_slice %7 {offsets = [0, 2], sizes = [4, 254], strides = [1, 1]} : vector<4x256xbf16> to vector<4x254xbf16>
    %13 = tpu.concatenate %12, %11 in 1 : vector<4x254xbf16>, vector<4x2xbf16> -> vector<4x256xbf16>
    %14 = tpu.concatenate %10, %7, %13, %7 in 0 : vector<4x256xbf16>, vector<4x256xbf16>, vector<4x256xbf16>, vector<4x256xbf16> -> vector<16x256xbf16>
    %cst_13 = arith.constant dense<0.000000e+00> : vector<40x256xf32>
    %15 = tpu.matmul %2, %14, %cst_13 {dimension_numbers = #tpu.dot_dimension_numbers<[1], [0], [0], [1], [0, 0, 1, 1], [], []>} : vector<40x16xbf16>, vector<16x256xbf16>, vector<40x256xf32> -> vector<40x256xf32>
    %16 = vector.broadcast %3 : vector<40x1xf32> to vector<40x256xf32>
    %17 = arith.addf %15, %16 : vector<40x256xf32>
    %18 = vector.extract_strided_slice %17 {offsets = [0, 0], sizes = [32, 256], strides = [1, 1]} : vector<40x256xf32> to vector<32x256xf32>
    %19 = vector.extract_strided_slice %17 {offsets = [32, 0], sizes = [8, 256], strides = [1, 1]} : vector<40x256xf32> to vector<8x256xf32>
    %cst_14 = arith.constant 0.000000e+00 : f32
    %20 = vector.broadcast %cst_14 : f32 to vector<32x256xf32>
    %21 = arith.cmpf oge, %18, %20 : vector<32x256xf32>
    %22 = vector.broadcast %0 : f32 to vector<32x256xf32>
    %23 = arith.mulf %22, %18 : vector<32x256xf32>
    %24 = arith.select %21, %18, %23 : vector<32x256xi1>, vector<32x256xf32>
    %25 = arith.truncf %24 : vector<32x256xf32> to vector<32x256xbf16>
    %cst_15 = arith.constant 0.000000e+00 : bf16
    %26 = vector.broadcast %cst_15 : bf16 to vector<32x2xbf16>
    %27 = vector.extract_strided_slice %25 {offsets = [0, 0], sizes = [32, 254], strides = [1, 1]} : vector<32x256xbf16> to vector<32x254xbf16>
    %28 = tpu.concatenate %26, %27 in 1 : vector<32x2xbf16>, vector<32x254xbf16> -> vector<32x256xbf16>
    %cst_16 = arith.constant 0.000000e+00 : bf16
    %29 = vector.broadcast %cst_16 : bf16 to vector<32x2xbf16>
    %30 = vector.extract_strided_slice %25 {offsets = [0, 2], sizes = [32, 254], strides = [1, 1]} : vector<32x256xbf16> to vector<32x254xbf16>
    %31 = tpu.concatenate %30, %29 in 1 : vector<32x254xbf16>, vector<32x2xbf16> -> vector<32x256xbf16>
    %32 = tpu.concatenate %28, %25, %31 in 0 : vector<32x256xbf16>, vector<32x256xbf16>, vector<32x256xbf16> -> vector<96x256xbf16>
    %cst_17 = arith.constant dense<0.000000e+00> : vector<8x256xf32>
    %33 = tpu.matmul %4, %32, %cst_17 {dimension_numbers = #tpu.dot_dimension_numbers<[1], [0], [0], [1], [0, 0, 1, 1], [], []>} : vector<8x96xbf16>, vector<96x256xbf16>, vector<8x256xf32> -> vector<8x256xf32>
    %34 = vector.broadcast %5 : vector<8x1xf32> to vector<8x256xf32>
    %35 = arith.addf %33, %34 : vector<8x256xf32>
    %cst_18 = arith.constant 0.000000e+00 : f32
    %36 = vector.broadcast %cst_18 : f32 to vector<8x256xf32>
    %37 = arith.cmpf oge, %35, %36 : vector<8x256xf32>
    %38 = vector.broadcast %1 : f32 to vector<8x256xf32>
    %39 = arith.mulf %38, %35 : vector<8x256xf32>
    %40 = arith.select %37, %35, %39 : vector<8x256xi1>, vector<8x256xf32>
    %41 = arith.addf %40, %19 : vector<8x256xf32>
    %c0_19 = arith.constant 0 : index
    %c0_20 = arith.constant 0 : index
    %c0_21 = arith.constant 0 : index
    %42 = vector.load %arg8[%c0_19, %c0_20, %c0_21] : memref<1x8x256xf32, #tpu.memory_space<vmem>>, vector<1x8x256xf32>
    %43 = vector.shape_cast %42 : vector<1x8x256xf32> to vector<8x256xf32>
    %44 = vector.shape_cast %41 : vector<8x256xf32> to vector<1x8x256xf32>
    tpu.vector_store %arg8[%c0_19, %c0_20, %c0_21], %44 {strides = array<i32>} : memref<1x8x256xf32, #tpu.memory_space<vmem>>, vector<1x8x256xf32>,
    return
  }
  func.func @transform_0(%arg0: i32) -> (i32, i32, i32) {
    %c0_i32 = arith.constant 0 : i32
    %c0_i32_0 = arith.constant 0 : i32
    %c0_i32_1 = arith.constant 0 : i32
    return %arg0, %c0_i32, %c0_i32_0 : i32, i32, i32
  }
  func.func @transform_1(%arg0: i32) -> (i32, i32) {
    %c0_i32 = arith.constant 0 : i32
    %c0_i32_0 = arith.constant 0 : i32
    %c0_i32_1 = arith.constant 0 : i32
    return %c0_i32, %c0_i32_0 : i32, i32
  }
  func.func @transform_2(%arg0: i32) -> (i32, i32) {
    %c0_i32 = arith.constant 0 : i32
    %c0_i32_0 = arith.constant 0 : i32
    %c0_i32_1 = arith.constant 0 : i32
    return %c0_i32, %c0_i32_0 : i32, i32
  }
  func.func @transform_3(%arg0: i32) -> (i32, i32) {
    %c0_i32 = arith.constant 0 : i32
    %c0_i32_0 = arith.constant 0 : i32
    %c0_i32_1 = arith.constant 0 : i32
    return %c0_i32, %c0_i32_0 : i32, i32
  }
  func.func @transform_4(%arg0: i32) -> (i32, i32) {
    %c0_i32 = arith.constant 0 : i32
    %c0_i32_0 = arith.constant 0 : i32
    %c0_i32_1 = arith.constant 0 : i32
    return %c0_i32, %c0_i32_0 : i32, i32
  }
  func.func @transform_5(%arg0: i32) -> i32 {
    %c0_i32 = arith.constant 0 : i32
    %c0_i32_0 = arith.constant 0 : i32
    return %c0_i32 : i32
  }
  func.func @transform_6(%arg0: i32) -> i32 {
    %c0_i32 = arith.constant 0 : i32
    %c0_i32_0 = arith.constant 0 : i32
    return %c0_i32 : i32
  }
  func.func @transform_7(%arg0: i32) -> (i32, i32, i32) {
    %c0_i32 = arith.constant 0 : i32
    %c0_i32_0 = arith.constant 0 : i32
    %c0_i32_1 = arith.constant 0 : i32
    return %arg0, %c0_i32, %c0_i32_0 : i32, i32, i32
  }
}

</mosaic_0001>

<llo_original>
// kernel: tpu_custom_call.1
$region0: #{tpu_custom_call.1}
  #allocation0 [shape = 'u32[]', space=smem, size = 0x4, offset = 0x4, fixed_abs, tag = 'smem constant byte address 0x4 - core index']
  #allocation1 [shape = 'u32[144,128]{1,0:T(1,128)}', space=vmem, size = 0x12000, scoped, tag = 'internal scratch']
  #allocation2 [shape = 'f32[1]{0:T(128)S(6)}', space=smem, size = 0x200, scoped, tag = 'scoped memory for tpu_custom_call.1']
  #allocation3 [shape = 'f32[1]{0:T(128)S(6)}', space=smem, size = 0x200, scoped, tag = 'scoped memory for tpu_custom_call.1']
  %s0 = inlined_call_operand.vmem [shape: bf16[2,4,256], index: 0, kind: input, shape index: {}]
  %s1 = inlined_call_operand.vmem [shape: bf16[40,16], index: 1, kind: input, shape index: {}]
  %s2 = inlined_call_operand.vmem [shape: f32[40,1], index: 2, kind: input, shape index: {}]
  %s3 = inlined_call_operand.vmem [shape: bf16[8,96], index: 3, kind: input, shape index: {}]
  %s4 = inlined_call_operand.vmem [shape: f32[8,1], index: 4, kind: input, shape index: {}]
  %s5 = inlined_call_operand.<no memory space> [shape: f32[1], index: 5, kind: input, shape index: {}]
  %s6 = inlined_call_operand.<no memory space> [shape: f32[1], index: 6, kind: input, shape index: {}]
  %s7 = inlined_call_operand.hbm [shape: f32[2,8,256], index: 7, kind: output, shape index: {}]
  %s8 = sld [smem:[#allocation0]]
  $region61: #{tpu_custom_call.1} parent=0
    _
  %s10 = ssub.s32 1, %s8
  %s11 = scalar_select 0, %s10, %s8
  %12 = sst [smem:[#allocation2]] %s5
  %13 = sst [smem:[#allocation3]] %s6
  $region1: #{tpu_custom_call.1} parent=0
    #allocation4 [shape = 'u8[16384]{0}', space=vmem, size = 0x4000, scoped, tag = 'output window, operand 0']
    #allocation5 [shape = 's32[2]{0}', space=sflag, size = 0x8, scoped, tag = 'scoped memory for tpu_custom_call.1']
    %14 = vsyncpa [#allocation5], 0
    %s15 = scalar_lea.sflag [#allocation5], 1
    %16 = vsyncpa %s15, 0
    loop: start=0, step=1, limit=4
    $region2: #{tpu_custom_call.1} parent=1 // loop_pre_header
      _
    $region3: #{tpu_custom_call.1} parent=1 // loop_header
      %s18 = sphi 0, %s22
      %p19 = scmp.ge.s32.totalorder %s18, 4
      %s28 = sphi 0, %s30
      %s31 = sphi 0, %s28
      %s32 = sphi 0, %s31
      %s48 = sphi 0, %s32
      %s52 = sphi 0, %s52
      %s54 = sphi 0, %s52
      %s55 = sphi 0, %s54
      %s69 = sphi 0, %s55
      %s73 = sphi 0, %s73
      %s75 = sphi 0, %s73
      %s76 = sphi 0, %s75
      %s90 = sphi 0, %s76
      %s94 = sphi 0, %s94
      %s96 = sphi 0, %s94
      %s97 = sphi 0, %s96
      %s111 = sphi 0, %s97
      %s115 = sphi 0, %s115
      %s117 = sphi 0, %s115
      %s118 = sphi 0, %s117
      %s132 = sphi 0, %s118
      %s136 = sphi 0, %s136
      %s138 = sphi 0, %s136
      %s139 = sphi 0, %s138
      %s153 = sphi 0, %s139
      %s157 = sphi 0, %s157
      %s159 = sphi 0, %s157
      %s160 = sphi 0, %s159
      %s174 = sphi 0, %s160
      %s180 = sphi 0, %s182
      %s183 = sphi 0, %s180
      %s184 = sphi 0, %s183
      %s200 = sphi 0, %s184
    $region4: #{tpu_custom_call.1} parent=1 // loop_header_branch
      %21 = sbr.rel (%p19) target = $region8
    $region5: #{tpu_custom_call.1} parent=1 // loop_body
      %s23 = ssub.s32 %s18, 1
      %s24 = ssub.s32 %s18, 2
      %s25 = sadd.s32 %s18, 1
      %s26 = ssub.s32 %s18, %s25
      %p27 = scmp.eq.s32.totalorder %s26, 0
      %s29 = sadd.s32 %s28, 1
      %s30 = scalar_select %p27, %s28, %s29
      %p33 = pneg %p27
      %p34 = scmp.eq.s32.totalorder %s18, 1
      %p35 = por %p33, %p34
      %p36 = scmp.ne.s32.totalorder %s28, %s31
      %p37 = scmp.eq.s32.totalorder %s18, 0
      %p38 = por %p36, %p37
      %p39 = scmp.ne.s32.totalorder %s28, %s31
      %p40 = scmp.eq.s32.totalorder %s23, 1
      %p41 = por %p39, %p40
      %p42 = scmp.ne.s32.totalorder %s31, %s32
      %p43 = scmp.eq.s32.totalorder %s23, 0
      %p44 = por %p42, %p43
      %p45 = scmp.ne.s32.totalorder %s31, %s32
      %p46 = scmp.eq.s32.totalorder %s24, 1
      %p47 = por %p45, %p46
      %p49 = scmp.ne.s32.totalorder %s32, %s48
      %p50 = scmp.eq.s32.totalorder %s24, 0
      %p51 = por %p49, %p50
      %s53 = sadd.s32 %s52, 1
      %p56 = scmp.eq.s32.totalorder %s18, 1
      %p57 = scmp.ne.s32.totalorder %s52, %s54
      %p58 = scmp.eq.s32.totalorder %s18, 0
      %p59 = por %p57, %p58
      %p60 = scmp.ne.s32.totalorder %s52, %s54
      %p61 = scmp.eq.s32.totalorder %s23, 1
      %p62 = por %p60, %p61
      %p63 = scmp.ne.s32.totalorder %s54, %s55
      %p64 = scmp.eq.s32.totalorder %s23, 0
      %p65 = por %p63, %p64
      %p66 = scmp.ne.s32.totalorder %s54, %s55
      %p67 = scmp.eq.s32.totalorder %s24, 1
      %p68 = por %p66, %p67
      %p70 = scmp.ne.s32.totalorder %s55, %s69
      %p71 = scmp.eq.s32.totalorder %s24, 0
      %p72 = por %p70, %p71
      %s74 = sadd.s32 %s73, 1
      %p77 = scmp.eq.s32.totalorder %s18, 1
      %p78 = scmp.ne.s32.totalorder %s73, %s75
      %p79 = scmp.eq.s32.totalorder %s18, 0
      %p80 = por %p78, %p79
      %p81 = scmp.ne.s32.totalorder %s73, %s75
      %p82 = scmp.eq.s32.totalorder %s23, 1
      %p83 = por %p81, %p82
      %p84 = scmp.ne.s32.totalorder %s75, %s76
      %p85 = scmp.eq.s32.totalorder %s23, 0
      %p86 = por %p84, %p85
      %p87 = scmp.ne.s32.totalorder %s75, %s76
      %p88 = scmp.eq.s32.totalorder %s24, 1
      %p89 = por %p87, %p88
      %p91 = scmp.ne.s32.totalorder %s76, %s90
      %p92 = scmp.eq.s32.totalorder %s24, 0
      %p93 = por %p91, %p92
      %s95 = sadd.s32 %s94, 1
      %p98 = scmp.eq.s32.totalorder %s18, 1
      %p99 = scmp.ne.s32.totalorder %s94, %s96
      %p100 = scmp.eq.s32.totalorder %s18, 0
      %p101 = por %p99, %p100
      %p102 = scmp.ne.s32.totalorder %s94, %s96
      %p103 = scmp.eq.s32.totalorder %s23, 1
      %p104 = por %p102, %p103
      %p105 = scmp.ne.s32.totalorder %s96, %s97
      %p106 = scmp.eq.s32.totalorder %s23, 0
      %p107 = por %p105, %p106
      %p108 = scmp.ne.s32.totalorder %s96, %s97
      %p109 = scmp.eq.s32.totalorder %s24, 1
      %p110 = por %p108, %p109
      %p112 = scmp.ne.s32.totalorder %s97, %s111
      %p113 = scmp.eq.s32.totalorder %s24, 0
      %p114 = por %p112, %p113
      %s116 = sadd.s32 %s115, 1
      %p119 = scmp.eq.s32.totalorder %s18, 1
      %p120 = scmp.ne.s32.totalorder %s115, %s117
      %p121 = scmp.eq.s32.totalorder %s18, 0
      %p122 = por %p120, %p121
      %p123 = scmp.ne.s32.totalorder %s115, %s117
      %p124 = scmp.eq.s32.totalorder %s23, 1
      %p125 = por %p123, %p124
      %p126 = scmp.ne.s32.totalorder %s117, %s118
      %p127 = scmp.eq.s32.totalorder %s23, 0
      %p128 = por %p126, %p127
      %p129 = scmp.ne.s32.totalorder %s117, %s118
      %p130 = scmp.eq.s32.totalorder %s24, 1
      %p131 = por %p129, %p130
      %p133 = scmp.ne.s32.totalorder %s118, %s132
      %p134 = scmp.eq.s32.totalorder %s24, 0
      %p135 = por %p133, %p134
      %s137 = sadd.s32 %s136, 1
      %p140 = scmp.eq.s32.totalorder %s18, 1
      %p141 = scmp.ne.s32.totalorder %s136, %s138
      %p142 = scmp.eq.s32.totalorder %s18, 0
      %p143 = por %p141, %p142
      %p144 = scmp.ne.s32.totalorder %s136, %s138
      %p145 = scmp.eq.s32.totalorder %s23, 1
      %p146 = por %p144, %p145
      %p147 = scmp.ne.s32.totalorder %s138, %s139
      %p148 = scmp.eq.s32.totalorder %s23, 0
      %p149 = por %p147, %p148
      %p150 = scmp.ne.s32.totalorder %s138, %s139
      %p151 = scmp.eq.s32.totalorder %s24, 1
      %p152 = por %p150, %p151
      %p154 = scmp.ne.s32.totalorder %s139, %s153
      %p155 = scmp.eq.s32.totalorder %s24, 0
      %p156 = por %p154, %p155
      %s158 = sadd.s32 %s157, 1
      %p161 = scmp.eq.s32.totalorder %s18, 1
      %p162 = scmp.ne.s32.totalorder %s157, %s159
      %p163 = scmp.eq.s32.totalorder %s18, 0
      %p164 = por %p162, %p163
      %p165 = scmp.ne.s32.totalorder %s157, %s159
      %p166 = scmp.eq.s32.totalorder %s23, 1
      %p167 = por %p165, %p166
      %p168 = scmp.ne.s32.totalorder %s159, %s160
      %p169 = scmp.eq.s32.totalorder %s23, 0
      %p170 = por %p168, %p169
      %p171 = scmp.ne.s32.totalorder %s159, %s160
      %p172 = scmp.eq.s32.totalorder %s24, 1
      %p173 = por %p171, %p172
      %p175 = scmp.ne.s32.totalorder %s160, %s174
      %p176 = scmp.eq.s32.totalorder %s24, 0
      %p177 = por %p175, %p176
      %s178 = ssub.s32 %s18, %s25
      %p179 = scmp.eq.s32.totalorder %s178, 0
      %s181 = sadd.s32 %s180, 1
      %s182 = scalar_select %p179, %s180, %s181
      %p185 = pneg %p179
      %p186 = scmp.eq.s32.totalorder %s18, 1
      %p187 = por %p185, %p186
      %p188 = scmp.ne.s32.totalorder %s180, %s183
      %p189 = scmp.eq.s32.totalorder %s18, 0
      %p190 = por %p188, %p189
      %p191 = scmp.ne.s32.totalorder %s180, %s183
      %p192 = scmp.eq.s32.totalorder %s23, 1
      %p193 = por %p191, %p192
      %p194 = scmp.ne.s32.totalorder %s183, %s184
      %p195 = scmp.eq.s32.totalorder %s23, 0
      %p196 = por %p194, %p195
      %p197 = scmp.ne.s32.totalorder %s183, %s184
      %p198 = scmp.eq.s32.totalorder %s24, 1
      %p199 = por %p197, %p198
      %p201 = scmp.ne.s32.totalorder %s184, %s200
      %p202 = scmp.eq.s32.totalorder %s24, 0
      %p203 = por %p201, %p202
      %p204 = scmp.le.s32.totalorder 1, %s18
      %p205 = scmp.lt.s32.totalorder %s18, 3
      %p206 = pnand %p204, %p205
      %p207 = pneg %p206
      // Predicated region
      $region9: #{tpu_custom_call.1} parent=5 // pred_check
        _
      $region10: #{tpu_custom_call.1} parent=5 // pred_check_branch
        %209 = sbr.rel (%p206) target = $region12
      $region11: #{tpu_custom_call.1} parent=5 // pred_region
        %s210 = ssub.s32 %s18, 1
        // Predicated region
        $region13: #{tpu_custom_call.1} parent=11 // pred_check
          %p211 = pneg %p65
        $region14: #{tpu_custom_call.1} parent=11 // pred_check_branch
          %213 = sbr.rel (%p211) target = $region16
        $region15: #{tpu_custom_call.1} parent=11 // pred_region
          _
        $region16: #{tpu_custom_call.1} parent=11 // pred_fallthru
          _
        // Predicated region
        $region17: #{tpu_custom_call.1} parent=11 // pred_check
          %p214 = pneg %p86
        $region18: #{tpu_custom_call.1} parent=11 // pred_check_branch
          %216 = sbr.rel (%p214) target = $region20
        $region19: #{tpu_custom_call.1} parent=11 // pred_region
          _
        $region20: #{tpu_custom_call.1} parent=11 // pred_fallthru
          _
        // Predicated region
        $region21: #{tpu_custom_call.1} parent=11 // pred_check
          %p217 = pneg %p107
        $region22: #{tpu_custom_call.1} parent=11 // pred_check_branch
          %219 = sbr.rel (%p217) target = $region24
        $region23: #{tpu_custom_call.1} parent=11 // pred_region
          _
        $region24: #{tpu_custom_call.1} parent=11 // pred_fallthru
          _
        // Predicated region
        $region25: #{tpu_custom_call.1} parent=11 // pred_check
          %p220 = pneg %p128
        $region26: #{tpu_custom_call.1} parent=11 // pred_check_branch
          %222 = sbr.rel (%p220) target = $region28
        $region27: #{tpu_custom_call.1} parent=11 // pred_region
          _
        $region28: #{tpu_custom_call.1} parent=11 // pred_fallthru
          _
        // Predicated region
        $region29: #{tpu_custom_call.1} parent=11 // pred_check
          %p223 = pneg %p149
        $region30: #{tpu_custom_call.1} parent=11 // pred_check_branch
          %225 = sbr.rel (%p223) target = $region32
        $region31: #{tpu_custom_call.1} parent=11 // pred_region
          _
        $region32: #{tpu_custom_call.1} parent=11 // pred_fallthru
          _
        // Predicated region
        $region33: #{tpu_custom_call.1} parent=11 // pred_check
          %p226 = pneg %p170
        $region34: #{tpu_custom_call.1} parent=11 // pred_check_branch
          %228 = sbr.rel (%p226) target = $region36
        $region35: #{tpu_custom_call.1} parent=11 // pred_region
          _
        $region36: #{tpu_custom_call.1} parent=11 // pred_fallthru
          _
      $region12: #{tpu_custom_call.1} parent=5 // pred_fallthru
        _
      %p229 = scmp.lt.s32.totalorder %s18, 2
      // Predicated region
      $region37: #{tpu_custom_call.1} parent=5 // pred_check
        %p230 = pneg %p229
      $region38: #{tpu_custom_call.1} parent=5 // pred_check_branch
        %232 = sbr.rel (%p230) target = $region40
      $region39: #{tpu_custom_call.1} parent=5 // pred_region
        // Predicated region
        $region41: #{tpu_custom_call.1} parent=39 // pred_check
          %p233 = pneg %p38
        $region42: #{tpu_custom_call.1} parent=39 // pred_check_branch
          %235 = sbr.rel (%p233) target = $region44
        $region43: #{tpu_custom_call.1} parent=39 // pred_region
          %p236 = scmp.lt.s32.totalorder %s18, 1
          %s237 = scalar_select %p236, %s18, 1
          %s238 = smul.addr %s237, 2
          %s239 = smul.addr %s238, 2
          %s240 = scalar_lea.vmem %s0, %s239
        $region44: #{tpu_custom_call.1} parent=39 // pred_fallthru
          _
      $region40: #{tpu_custom_call.1} parent=5 // pred_fallthru
        _
      %p241 = scmp.le.s32.totalorder 1, %s18
      %p242 = scmp.lt.s32.totalorder %s18, 3
      %p243 = pnand %p241, %p242
      %p244 = pneg %p243
      // Predicated region
      $region45: #{tpu_custom_call.1} parent=5 // pred_check
        _
      $region46: #{tpu_custom_call.1} parent=5 // pred_check_branch
        %246 = sbr.rel (%p243) target = $region48
      $region47: #{tpu_custom_call.1} parent=5 // pred_region
        %s247 = ssub.s32 %s18, 1
        %p248 = scmp.lt.s32.totalorder %s23, 1
        %s249 = scalar_select %p248, %s23, 1
        %s250 = smul.addr %s249, 2
        %s251 = smul.addr %s250, 2
        %s252 = scalar_lea.vmem %s0, %s251
        %p253 = pneg %p44
        %p254 = pneg %p41
        %p255 = pneg %p65
        %p256 = pneg %p62
        %p257 = pneg %p86
        %p258 = pneg %p83
        %p259 = pneg %p107
        %p260 = pneg %p104
        %p261 = pneg %p128
        %p262 = pneg %p125
        %p263 = pneg %p149
        %p264 = pneg %p146
        %p265 = pneg %p170
        %p266 = pneg %p167
        %p267 = pneg %p196
        %p268 = pneg %p193
        %s269 = sand.u32 %s183, 1
        %s270 = scalar_lea.sflag [#allocation5], %s269
        %s271 = sand.u32 %s183, 1
        %s272 = smul.addr %s271, 16
        %s273 = scalar_lea.vmem [#allocation4], %s272
        %p274 = scmp.lt.s32.totalorder %s23, 1
        %s275 = scalar_select %p274, %s23, 1
        %s276 = smul.addr %s275, 2
        %s277 = smul.addr %s276, 2
        %s278 = scalar_lea.vmem %s0, %s277
        %s280 = sld [smem:[#allocation2]]
        %s281 = sld [smem:[#allocation3]]
        %v282 = vld [vmem:[%s1] sm:$0xf]
        %v283 = vld [vmem:[%s1 + $0x4] sm:$0xf]
        %v284 = vld [vmem:[%s1 + $0x8] sm:$0xf]
        %v285 = vld [vmem:[%s1 + $0xc] sm:$0xf]
        %v286 = vld [vmem:[%s1 + $0x10] sm:$0xf]
        %v287 = vld [vmem:[%s2] sm:$0xff]
        %v288 = vld [vmem:[%s2 + $0x8] sm:$0xff]
        %v289 = vld [vmem:[%s2 + $0x10] sm:$0xff]
        %v290 = vld [vmem:[%s2 + $0x18] sm:$0xff]
        %v291 = vld [vmem:[%s2 + $0x20] sm:$0xff]
        %v292 = vld [vmem:[%s3] sm:$0xf]
        %v293 = vld [vmem:[%s4] sm:$0xff]
        %v294 = vld [vmem:[%s278] sm:$0xf]
        %v297 = vunpack.c.l.s4 1983009808
        %v298 = vunpack.c.0.s8 %v297
        %v299 = vlaneseq
        %v300 = vshrl.u32 %v299, 7
        %v301 = vsub.s32 %v298, %v300
        %v302 = vrot.slane %v294, %v301
        %v303 = vcombine.high %v302, %v302
        %304 = vrot.lane.b32.xlu0 %v302, 2
        %v305 = vpop.permute.xlu0 %304
        %306 = vrot.lane.b32.xlu0 %v303, 2
        %v307 = vpop.permute.xlu0 %306
        %vm308 = vcmask 15360
        %v309 = vsel %vm308, %v305, %v307
        %vm310 = vcmask 15360
        %v313 = vsel %vm310, 0, %v305
        %314 = vrot.lane.b32.xlu0 %v302, 126
        %v315 = vpop.permute.xlu0 %314
        %316 = vrot.lane.b32.xlu0 %v303, 126
        %v317 = vpop.permute.xlu0 %316
        %vm318 = vcmask 1031168
        %v319 = vsel %vm318, %v315, %v317
        %vm320 = vcmask 1031168
        %v322 = vsel %vm320, %v317, 0
        %v323 = vcombine.low %v294, %v294
        %v325 = vunpack.c.l.s4 1983009808
        %v326 = vunpack.c.0.s8 %v325
        %v327 = vlaneseq
        %v328 = vshrl.u32 %v327, 7
        %v329 = vsub.s32 %v326, %v328
        %v330 = vrot.slane %v323, %v329
        %v331 = vcombine.high %v330, %v330
        %v333 = vrot.slane %v319, 4
        %v334 = vrot.slane %v322, 4
        %v335 = vcombine.low %v330, %v330
        %vm336 = vcmask 1041408
        %v338 = vsel %vm336, %v313, %v330
        %v341 = vsel %vm336, %v309, %v331
        %vm342 = vcmask 1043456
        %v344 = vsel %vm342, %v338, %v333
        %v346 = vsel %vm342, %v341, %v334
        %vm347 = vcmask 1045504
        %v349 = vsel %vm347, %v344, %v335
        %v351 = vsel %vm347, %v346, %v330
        %354 = vset.pattern.permute.xlu0 0
        %355 = vperm.xlu0 %354, %v287
        %v356 = vpop.permute.xlu0 %355
        %359 = vset.pattern.permute.xlu0 0
        %360 = vperm.xlu0 %359, %v288
        %v361 = vpop.permute.xlu0 %360
        %364 = vset.pattern.permute.xlu0 0
        %365 = vperm.xlu0 %364, %v289
        %v366 = vpop.permute.xlu0 %365
        %369 = vset.pattern.permute.xlu0 0
        %370 = vperm.xlu0 %369, %v290
        %v371 = vpop.permute.xlu0 %370
        %374 = vset.pattern.permute.xlu0 0
        %375 = vperm.xlu0 %374, %v291
        %v376 = vpop.permute.xlu0 %375
        %v383 = vunpack.c.l.b16 %v282
        %v384 = vunpack.c.l.b16 %v283
        %v385 = vunpack.c.l.b16 %v284
        %v386 = vunpack.c.l.b16 %v285
        %v387 = vunpack.c.l.b16 %v286
        %v388 = vpack.c.b16 %v384, %v383
        %v389 = vpack.c.b16 %v386, %v385
        %v390 = vpack.c.b16 %v387, %v387
        %vm391 = vcmask 130048
        %v393 = vsel %vm391, %v388, 0
        %v396 = vsel %vm391, %v389, 0
        %v399 = vsel %vm391, %v390, 0
        %401 = vmatprep.subr.bf16.mxu0 %v351
        %402 = vmatpush1.bf16.msra.mxu0 %v349
        %403 = vmatprep.subr.bf16.mxu0 0
        %404 = vmatpush1.bf16.msra.mxu0 0
        %405 = vmatprep.subr.bf16.mxu0 0
        %406 = vmatpush1.bf16.msra.mxu0 0
        %407 = vmatprep.subr.bf16.mxu0 0
        %408 = vmatpush1.bf16.msra.mxu0 0
        %409 = vmatprep.subr.bf16.mxu0 0
        %410 = vmatpush1.bf16.msra.mxu0 0
        %411 = vmatprep.subr.bf16.mxu0 0
        %412 = vmatpush1.bf16.msra.mxu0 0
        %413 = vmatprep.subr.bf16.mxu0 0
        %414 = vmatpush1.bf16.msra.mxu0 0
        %415 = vmatprep.subr.bf16.mxu0 0
        %416 = vmatpush1.bf16.msra.mxu0 0
        %417 = vmatprep.subr.bf16.mxu0 0
        %418 = vmatpush1.bf16.msra.mxu0 0
        %419 = vmatprep.subr.bf16.mxu0 0
        %420 = vmatpush1.bf16.msra.mxu0 0
        %421 = vmatprep.subr.bf16.mxu0 0
        %422 = vmatpush1.bf16.msra.mxu0 0
        %423 = vmatprep.subr.bf16.mxu0 0
        %424 = vmatpush1.bf16.msra.mxu0 0
        %425 = vmatprep.subr.bf16.mxu0 0
        %426 = vmatpush1.bf16.msra.mxu0 0
        %427 = vmatprep.subr.bf16.mxu0 0
        %428 = vmatpush1.bf16.msra.mxu0 0
        %429 = vmatprep.subr.bf16.mxu0 0
        %430 = vmatpush1.bf16.msra.mxu0 0
        %431 = vmatprep.subr.bf16.mxu0 0
        %432 = vmatpush1.bf16.msra.mxu0 0
        %433 = vmatprep.mubr.bf16.mxu0 0
        %434 = vmatmul.mubr.bf16.gmra.mrb[0].mxu0 %v393
        %v435 = vpop.f32.mrb[0].mxu0
        %v436 = vadd.f32 %v356, %v435
        %v437 = vpop.f32.mrb[0].mxu0
        %v438 = vadd.f32 %v356, %v437
        %v439 = vpop.f32.mrb[0].mxu0
        %v440 = vadd.f32 %v361, %v439
        %v441 = vpop.f32.mrb[0].mxu0
        %v442 = vadd.f32 %v361, %v441
        %443 = vmatprep.mubr.bf16.mxu0 0
        %444 = vmatmul.mubr.bf16.gmra.mrb[0].mxu0 %v396
        %v445 = vpop.f32.mrb[0].mxu0
        %v446 = vadd.f32 %v366, %v445
        %v447 = vpop.f32.mrb[0].mxu0
        %v448 = vadd.f32 %v366, %v447
        %v449 = vpop.f32.mrb[0].mxu0
        %v450 = vadd.f32 %v371, %v449
        %v451 = vpop.f32.mrb[0].mxu0
        %v452 = vadd.f32 %v371, %v451
        %453 = vmatprep.mubr.bf16.mxu0 0
        %454 = vmatmul.mubr.bf16.gmra.mrb[0].mxu0 %v399
        %v455 = vpop.f32.mrb[0].mxu0
        %v456 = vadd.f32 %v376, %v455
        %v457 = vpop.f32.mrb[0].mxu0
        %v458 = vadd.f32 %v376, %v457
        %v459 = vpop.f32.mrb[0].mxu0
        %v460 = vpop.f32.mrb[0].mxu0
        %461 = vdwg.mxu0
        %vm462 = vcmp.ge.f32.partialorder %v436, 0.0
        %vm463 = vcmp.ge.f32.partialorder %v438, 0.0
        %vm464 = vcmp.ge.f32.partialorder %v440, 0.0
        %vm465 = vcmp.ge.f32.partialorder %v442, 0.0
        %vm466 = vcmp.ge.f32.partialorder %v446, 0.0
        %vm467 = vcmp.ge.f32.partialorder %v448, 0.0
        %vm468 = vcmp.ge.f32.partialorder %v450, 0.0
        %vm469 = vcmp.ge.f32.partialorder %v452, 0.0
        %v470 = vstv %s280
        %v471 = vmul.f32 %v470, %v436
        %v472 = vmul.f32 %v470, %v438
        %v473 = vmul.f32 %v470, %v440
        %v474 = vmul.f32 %v470, %v442
        %v475 = vmul.f32 %v470, %v446
        %v476 = vmul.f32 %v470, %v448
        %v477 = vmul.f32 %v470, %v450
        %v478 = vmul.f32 %v470, %v452
        %v479 = vsel %vm462, %v436, %v471
        %v480 = vsel %vm463, %v438, %v472
        %v481 = vsel %vm464, %v440, %v473
        %v482 = vsel %vm465, %v442, %v474
        %v483 = vsel %vm466, %v446, %v475
        %v484 = vsel %vm467, %v448, %v476
        %v485 = vsel %vm468, %v450, %v477
        %v486 = vsel %vm469, %v452, %v478
        %v487 = vpack.c.bf16 %v481, %v479
        %v488 = vpack.c.bf16 %v482, %v480
        %v489 = vpack.c.bf16 %v485, %v483
        %v490 = vpack.c.bf16 %v486, %v484
        %495 = vrot.lane.b32.xlu0 %v487, 2
        %v496 = vpop.permute.xlu0 %495
        %497 = vrot.lane.b32.xlu0 %v488, 2
        %v498 = vpop.permute.xlu0 %497
        %499 = vrot.lane.b32.xlu0 %v489, 2
        %v500 = vpop.permute.xlu0 %499
        %501 = vrot.lane.b32.xlu0 %v490, 2
        %v502 = vpop.permute.xlu0 %501
        %v503 = vsel %vm308, %v496, %v498
        %v504 = vsel %vm308, %v500, %v502
        %v508 = vsel %vm310, 0, %v496
        %v511 = vsel %vm310, 0, %v500
        %513 = vrot.lane.b32.xlu0 %v487, 126
        %v514 = vpop.permute.xlu0 %513
        %515 = vrot.lane.b32.xlu0 %v488, 126
        %v516 = vpop.permute.xlu0 %515
        %517 = vrot.lane.b32.xlu0 %v489, 126
        %v518 = vpop.permute.xlu0 %517
        %519 = vrot.lane.b32.xlu0 %v490, 126
        %v520 = vpop.permute.xlu0 %519
        %v521 = vsel %vm318, %v514, %v516
        %v522 = vsel %vm318, %v518, %v520
        %v526 = vsel %vm320, %v516, 0
        %v529 = vsel %vm320, %v520, 0
        %532 = vset.pattern.permute.xlu0 0
        %533 = vperm.xlu0 %532, %v293
        %v534 = vpop.permute.xlu0 %533
        %vm536 = vcmask 785408
        %v538 = vsel %vm536, %v292, 0
        %540 = vmatprep.subr.bf16.mxu0 %v503
        %541 = vmatpush1.bf16.msra.mxu0 %v508
        %542 = vmatprep.subr.bf16.mxu0 %v504
        %543 = vmatpush1.bf16.msra.mxu0 %v511
        %544 = vmatprep.subr.bf16.mxu0 %v488
        %545 = vmatpush1.bf16.msra.mxu0 %v487
        %546 = vmatprep.subr.bf16.mxu0 %v490
        %547 = vmatpush1.bf16.msra.mxu0 %v489
        %548 = vmatprep.subr.bf16.mxu0 %v526
        %549 = vmatpush1.bf16.msra.mxu0 %v521
        %550 = vmatprep.subr.bf16.mxu0 %v529
        %551 = vmatpush1.bf16.msra.mxu0 %v522
        %552 = vmatprep.subr.bf16.mxu0 0
        %553 = vmatpush1.bf16.msra.mxu0 0
        %554 = vmatprep.subr.bf16.mxu0 0
        %555 = vmatpush1.bf16.msra.mxu0 0
        %556 = vmatprep.subr.bf16.mxu0 0
        %557 = vmatpush1.bf16.msra.mxu0 0
        %558 = vmatprep.subr.bf16.mxu0 0
        %559 = vmatpush1.bf16.msra.mxu0 0
        %560 = vmatprep.subr.bf16.mxu0 0
        %561 = vmatpush1.bf16.msra.mxu0 0
        %562 = vmatprep.subr.bf16.mxu0 0
        %563 = vmatpush1.bf16.msra.mxu0 0
        %564 = vmatprep.subr.bf16.mxu0 0
        %565 = vmatpush1.bf16.msra.mxu0 0
        %566 = vmatprep.subr.bf16.mxu0 0
        %567 = vmatpush1.bf16.msra.mxu0 0
        %568 = vmatprep.subr.bf16.mxu0 0
        %569 = vmatpush1.bf16.msra.mxu0 0
        %570 = vmatprep.subr.bf16.mxu0 0
        %571 = vmatpush1.bf16.msra.mxu0 0
        %572 = vmatprep.mubr.bf16.mxu0 0
        %573 = vmatmul.mubr.bf16.gmra.mrb[0].mxu0 %v538
        %v574 = vpop.f32.mrb[0].mxu0
        %v575 = vadd.f32 %v534, %v574
        %v576 = vpop.f32.mrb[0].mxu0
        %v577 = vadd.f32 %v534, %v576
        %v578 = vpop.f32.mrb[0].mxu0
        %v579 = vpop.f32.mrb[0].mxu0
        %580 = vdwg.mxu0
        %vm581 = vcmp.ge.f32.partialorder %v575, 0.0
        %vm582 = vcmp.ge.f32.partialorder %v577, 0.0
        %v583 = vstv %s281
        %v584 = vmul.f32 %v583, %v575
        %v585 = vmul.f32 %v583, %v577
        %v586 = vsel %vm581, %v575, %v584
        %v587 = vsel %vm582, %v577, %v585
        %v588 = vadd.f32 %v586, %v456
        %v589 = vadd.f32 %v587, %v458
        %590 = vst [vmem:[%s273] sm:$0xff] %v588
        %591 = vst [vmem:[%s273 + $0x8] sm:$0xff] %v589
        %s592 = sand.u32 %s183, 1
        %s593 = scalar_lea.sflag [#allocation5], %s592
        %s594 = sand.u32 %s183, 1
        %s595 = smul.addr %s594, 16
        %s596 = scalar_lea.vmem [#allocation4], %s595
        // Predicated region
        $region49: #{tpu_custom_call.1} parent=47 // pred_check
          %p597 = pneg %p193
        $region50: #{tpu_custom_call.1} parent=47 // pred_check_branch
          %599 = sbr.rel (%p597) target = $region52
        $region51: #{tpu_custom_call.1} parent=47 // pred_region
          %s601 = ssub.s32 256, 256
          %602 = vsyncadd %s593, %s601
          %s603 = smul.addr %s23, 2
          %s604 = smul.addr %s603, 128
          %s605 = scalar_lea.hbm %s7, %s604
          %s607 = sshll.u32 %s596, 4
          %s608 = int_to_ptr.vmem [resolvable:$true] %s607
          %610 = dma.vmem_to_hbm [thread:$0]  %s608, 256, %s605, %s593
        $region52: #{tpu_custom_call.1} parent=47 // pred_fallthru
          _
      $region48: #{tpu_custom_call.1} parent=5 // pred_fallthru
        _
      %p611 = scmp.le.s32.totalorder 2, %s18
      // Predicated region
      $region53: #{tpu_custom_call.1} parent=5 // pred_check
        %p612 = pneg %p611
      $region54: #{tpu_custom_call.1} parent=5 // pred_check_branch
        %614 = sbr.rel (%p612) target = $region56
      $region55: #{tpu_custom_call.1} parent=5 // pred_region
        %s615 = ssub.s32 %s18, 2
        // Predicated region
        $region57: #{tpu_custom_call.1} parent=55 // pred_check
          %p616 = pneg %p199
        $region58: #{tpu_custom_call.1} parent=55 // pred_check_branch
          %618 = sbr.rel (%p616) target = $region60
        $region59: #{tpu_custom_call.1} parent=55 // pred_region
          %s619 = sand.u32 %s184, 1
          %s620 = scalar_lea.sflag [#allocation5], %s619
          %s621 = sand.u32 %s184, 1
          %s622 = smul.addr %s621, 16
          %s623 = scalar_lea.vmem [#allocation4], %s622
          %624 = dma.done %s620, 256
        $region60: #{tpu_custom_call.1} parent=55 // pred_fallthru
          _
      $region56: #{tpu_custom_call.1} parent=5 // pred_fallthru
        _
    $region6: #{tpu_custom_call.1} parent=1 // loop_footer
      %s22 = sadd.s32 1, %s18
    $region7: #{tpu_custom_call.1} parent=1 // loop_footer_branch
      %17 = sbr.rel target = $region3
    $region8: #{tpu_custom_call.1} parent=1 // loop_exit
      _
    %625 = vsyncpa [#allocation5], 1
    %s626 = scalar_lea.sflag [#allocation5], 1
    %627 = vsyncpa %s626, 1

</llo_original>
